<compile_context>
chip_gen: v6e
topology: v6e:2x2x1
jax: 0.10.0
libtpu: 0.0.40
codegen_flags: <defaults>
</compile_context>

<pallas_src>
import functools

import jax
import jax.numpy as jnp
from jax import lax
from jax.experimental import pallas as pl
from jax.experimental.pallas import tpu as pltpu

# Raised from the 32 MiB scoped default (v5e/v6e have 128 MiB physical) but kept <= 48 MiB
# so the same kernel fits v7x's 64 MiB-per-TensorCore VMEM without a regime flip to spills.
_VMEM_LIMIT = 48 * 1024 * 1024


def _cdiv(a, b):
    return (a + b - 1) // b


def _round_up(a, b):
    return _cdiv(a, b) * b


def _pick_rows_per_block(n, target=1024):
    """Largest multiple of 8 that divides n and is <= target (n is a multiple of 8)."""
    best = 8
    r = 8
    top = min(n, target)
    while r <= top:
        if n % r == 0:
            best = r
        r += 8
    return best


# ---------------------------------------------------------------------------
# Kernel 1: fused fwd+bwd input projection (parallel over row tiles)
# ---------------------------------------------------------------------------
def _proj_kernel(x_ref, w_ref, b_ref, p_ref, *, mxu_dtype):
    # Bias (b_ih + b_hh per direction) folded in here so the sequential kernel has no
    # bias broadcast. Optional bf16 cast on the MXU operands only; accumulate in f32.
    x = x_ref[...].astype(mxu_dtype)
    w = w_ref[...].astype(mxu_dtype)
    p_ref[...] = jnp.dot(x, w, preferred_element_type=jnp.float32) + b_ref[...]


def _input_projections(x_flat, w_cat, b_cat, rows_per_block, mxu_dtype):
    N, D = x_flat.shape
    G2 = w_cat.shape[1]                       # 8H (fwd 4H | bwd 4H)
    nblk = N // rows_per_block
    full = lambda i: (0, 0)
    grid_spec = pltpu.PrefetchScalarGridSpec(
        num_scalar_prefetch=0,
        grid=(nblk,),
        in_specs=[
            pl.BlockSpec((rows_per_block, D), lambda i: (i, 0)),   # x row tile
            pl.BlockSpec((D, G2), full),                           # [W_ih_f | W_ih_b]
            pl.BlockSpec((1, G2), full),                           # [b_f | b_b]
        ],
        out_specs=pl.BlockSpec((rows_per_block, G2), lambda i: (i, 0)),
    )
    return pl.pallas_call(
        functools.partial(_proj_kernel, mxu_dtype=mxu_dtype),
        out_shape=jax.ShapeDtypeStruct((N, G2), jnp.float32),
        grid_spec=grid_spec,
        compiler_params=pltpu.CompilerParams(
            dimension_semantics=("parallel",),
            vmem_limit_bytes=_VMEM_LIMIT),
    )(x_flat, w_cat, b_cat)


# ---------------------------------------------------------------------------
# Kernel 2: sequential bidirectional recurrence over time chunks
# ---------------------------------------------------------------------------
def _recurrence_kernel(len_ref, pf_ref, pb_ref, wbd_ref,
                       fwd_out_ref, bwd_out_ref,
                       h_cat, c_cat, *, hidden, unroll):
    H = hidden
    G = 4 * H
    chunk = pl.program_id(0)
    nchunks = pl.num_programs(0)
    Tc = pf_ref.shape[0]

    @pl.when(chunk == 0)
    def _():
        h_cat[...] = jnp.zeros_like(h_cat)
        c_cat[...] = jnp.zeros_like(c_cat)

    lengths = len_ref[...]        # (B_pad, 1) int32, loaded once per chunk
    w_bd = wbd_ref[...]           # (2H, 8H) block-diagonal W_hh, hoisted out of the loop

    t0_f = chunk * Tc                     # first fwd global time of this chunk
    t0_b = (nchunks - 1 - chunk) * Tc     # first global time of the bwd chunk

    def gates_to_hc(g, c_prev):
        # PyTorch LSTMCell gate order: i, f, g, o.
        i = jax.nn.sigmoid(g[:, 0 * H:1 * H])
        f = jax.nn.sigmoid(g[:, 1 * H:2 * H])
        gg = jnp.tanh(g[:, 2 * H:3 * H])
        o = jax.nn.sigmoid(g[:, 3 * H:4 * H])
        c_new = f * c_prev + i * gg
        h_new = o * jnp.tanh(c_new)
        return h_new, c_new

    def step(s, carry):
        r = Tc - 1 - s
        # One MXU push per step covering BOTH directions:
        #   h_cat = [h_f | h_b] (B, 2H)  @  blockdiag(W_hh_f, W_hh_b) (2H, 8H)
        hh = jnp.dot(h_cat[...], w_bd, preferred_element_type=jnp.float32)   # (B, 8H)

        # ---- forward direction: global time t0_f + s ----
        g_f = pf_ref[s] + hh[:, :G]
        h_new, c_new = gates_to_hc(g_f, c_cat[:, :H])
        m_f = lengths > (t0_f + s)                                   # (B, 1) bool
        h_f = jnp.where(m_f, h_new, h_cat[:, :H])
        c_f = jnp.where(m_f, c_new, c_cat[:, :H])
        h_cat[:, :H] = h_f
        c_cat[:, :H] = c_f
        fwd_out_ref[s] = h_f

        # ---- backward direction: within-chunk reversed index ----
        g_b = pb_ref[r] + hh[:, G:]
        h_new, c_new = gates_to_hc(g_b, c_cat[:, H:])
        m_b = lengths > (t0_b + r)                                   # (B, 1) bool
        h_b = jnp.where(m_b, h_new, h_cat[:, H:])
        c_b = jnp.where(m_b, c_new, c_cat[:, H:])
        h_cat[:, H:] = h_b
        c_cat[:, H:] = c_b
        bwd_out_ref[r] = h_b
        return carry

    # Partial unroll: LLO visibility without the full-unroll vreg-pressure cliff.
    lax.fori_loop(0, Tc, step, 0, unroll=unroll)


# ---------------------------------------------------------------------------
# Wrapper
# ---------------------------------------------------------------------------
def bilstm_layer(x, lengths, params, *, time_chunk=32, mxu_dtype=jnp.float32):
    """x: (B, T, D) float32, lengths: (B,) int -> (B, T, 2H) float32.

    mxu_dtype=jnp.bfloat16 trades ~1e-3 error for 3-6x MXU throughput on the projection
    GEMM (v5e/v6e); default f32 keeps parity with the f32 PyTorch reference.
    """
    B, T, D = x.shape
    H = params["whh_f"].shape[0]
    G = 4 * H

    Tc = max(1, min(time_chunk, T))
    nchunks = _cdiv(T, Tc)
    T_pad = nchunks * Tc
    B_pad = _round_up(B, 8)          # sublane-dense batch (masks/state/outputs)

    # Pad batch (lengths=0 -> always masked, state stays 0) and time (masked by lengths),
    # go time-major so each recurrence step reads a contiguous (B_pad, 4H) tile.
    x_pad = jnp.pad(x.astype(jnp.float32),
                    ((0, B_pad - B), (0, T_pad - T), (0, 0)))
    x_tbd = jnp.transpose(x_pad, (1, 0, 2))                 # (T_pad, B_pad, D)
    x_flat = x_tbd.reshape(T_pad * B_pad, D)

    # --- fused parallel GEMM: P = x @ [W_f | W_b] + [b_f | b_b]  -> (N, 8H) ---
    w_cat = jnp.concatenate([params["wih_f"], params["wih_b"]], axis=1)   # (D, 8H)
    b_cat = jnp.concatenate([params["b_f"], params["b_b"]], axis=1)       # (1, 8H)
    N = T_pad * B_pad
    rows_per_block = _pick_rows_per_block(N, target=1024)
    p_flat = _input_projections(x_flat, w_cat, b_cat, rows_per_block, mxu_dtype)
    p = p_flat.reshape(T_pad, B_pad, 2 * G)                 # (T_pad, B_pad, 8H)

    # Block-diagonal recurrent weight: [h_f | h_b] @ W_bd = [gates_f | gates_b].
    w_bd = jnp.zeros((2 * H, 2 * G), jnp.float32)
    w_bd = w_bd.at[:H, :G].set(params["whh_f"])
    w_bd = w_bd.at[H:, G:].set(params["whh_b"])

    len2d = jnp.pad(lengths.astype(jnp.int32), (0, B_pad - B)).reshape(B_pad, 1)

    # Fwd reads lanes [0:4H] in forward time order; bwd reads lanes [4H:8H] in reversed
    # time order. When 4H is a multiple of 128 the same fused slab is passed twice with a
    # lane-offset BlockSpec (no extra HBM pass); otherwise split once in the wrapper.
    if G % 128 == 0:
        p_f_arg, p_b_arg = p, p
        pf_spec = pl.BlockSpec((Tc, B_pad, G), lambda c: (c, 0, 0))
        pb_spec = pl.BlockSpec((Tc, B_pad, G), lambda c: (nchunks - 1 - c, 0, 1))
    else:
        p_f_arg, p_b_arg = p[..., :G], p[..., G:]
        pf_spec = pl.BlockSpec((Tc, B_pad, G), lambda c: (c, 0, 0))
        pb_spec = pl.BlockSpec((Tc, B_pad, G), lambda c: (nchunks - 1 - c, 0, 0))

    grid_spec = pltpu.PrefetchScalarGridSpec(
        num_scalar_prefetch=0,
        grid=(nchunks,),
        in_specs=[
            pl.BlockSpec((B_pad, 1), lambda c: (0, 0)),               # lengths
            pf_spec,                                                  # P fwd lanes, fwd time
            pb_spec,                                                  # P bwd lanes, rev time
            pl.BlockSpec((2 * H, 2 * G), lambda c: (0, 0)),           # block-diag W_hh
        ],
        out_specs=[
            pl.BlockSpec((Tc, B_pad, H), lambda c: (c, 0, 0)),                # fwd_out
            pl.BlockSpec((Tc, B_pad, H), lambda c: (nchunks - 1 - c, 0, 0)),  # bwd_out
        ],
        scratch_shapes=[
            pltpu.VMEM((B_pad, 2 * H), jnp.float32),   # h_cat = [h_f | h_b]
            pltpu.VMEM((B_pad, 2 * H), jnp.float32),   # c_cat = [c_f | c_b]
        ],
    )

    kernel = functools.partial(_recurrence_kernel, hidden=H, unroll=min(8, Tc))
    fwd_out, bwd_out = pl.pallas_call(
        kernel,
        out_shape=(jax.ShapeDtypeStruct((T_pad, B_pad, H), jnp.float32),
                   jax.ShapeDtypeStruct((T_pad, B_pad, H), jnp.float32)),
        grid_spec=grid_spec,
        compiler_params=pltpu.CompilerParams(
            dimension_semantics=("arbitrary",),
            vmem_limit_bytes=_VMEM_LIMIT),
    )(len2d, p_f_arg, p_b_arg, w_bd)

    fwd = jnp.transpose(fwd_out[:T, :B], (1, 0, 2))   # (B, T, H)
    bwd = jnp.transpose(bwd_out[:T, :B], (1, 0, 2))   # (B, T, H)
    return jnp.concatenate([fwd, bwd], axis=-1)


# ---------------------------------------------------------------------------
# Params (nn.LSTMCell shapes, stored transposed so x @ W) and pure-JAX reference
# ---------------------------------------------------------------------------
def init_params(key, input_dim, hidden_dim):
    k = 1.0 / jnp.sqrt(jnp.float32(hidden_dim))
    keys = jax.random.split(key, 8)

    def u(kk, shape):
        return jax.random.uniform(kk, shape, jnp.float32, -k, k)

    wih_f = u(keys[0], (input_dim, 4 * hidden_dim))
    whh_f = u(keys[1], (hidden_dim, 4 * hidden_dim))
    b_f = u(keys[2], (1, 4 * hidden_dim)) + u(keys[3], (1, 4 * hidden_dim))
    wih_b = u(keys[4], (input_dim, 4 * hidden_dim))
    whh_b = u(keys[5], (hidden_dim, 4 * hidden_dim))
    b_b = u(keys[6], (1, 4 * hidden_dim)) + u(keys[7], (1, 4 * hidden_dim))
    return dict(wih_f=wih_f, whh_f=whh_f, b_f=b_f,
                wih_b=wih_b, whh_b=whh_b, b_b=b_b)


def ref_bilstm(x, lengths, params):
    """Pure-JAX reference matching the PyTorch forward exactly."""
    B, T, D = x.shape
    H = params["whh_f"].shape[0]

    def cell(x_t, h, c, wih, whh, b):
        gates = x_t @ wih + h @ whh + b
        i = jax.nn.sigmoid(gates[:, :H])
        f = jax.nn.sigmoid(gates[:, H:2 * H])
        g = jnp.tanh(gates[:, 2 * H:3 * H])
        o = jax.nn.sigmoid(gates[:, 3 * H:])
        c_new = f * c + i * g
        return o * jnp.tanh(c_new), c_new

    lf = lengths.astype(jnp.float32)[:, None]
    h = jnp.zeros((B, H)); c = jnp.zeros((B, H)); fwd = []
    for t in range(T):
        mask = (lf > t).astype(jnp.float32)
        hn, cn = cell(x[:, t], h, c, params["wih_f"], params["whh_f"], params["b_f"])
        h = hn * mask + h * (1 - mask)
        c = cn * mask + c * (1 - mask)
        fwd.append(h)
    fwd = jnp.stack(fwd, axis=1)

    h = jnp.zeros((B, H)); c = jnp.zeros((B, H)); bwd = [None] * T
    for t in reversed(range(T)):
        mask = (lf > t).astype(jnp.float32)
        hn, cn = cell(x[:, t], h, c, params["wih_b"], params["whh_b"], params["b_b"])
        h = hn * mask + h * (1 - mask)
        c = cn * mask + c * (1 - mask)
        bwd[t] = h
    bwd = jnp.stack(bwd, axis=1)
    return jnp.concatenate([fwd, bwd], axis=-1)


if __name__ == "__main__":
    B, T, D, H = 2, 12, 16, 32
    key = jax.random.PRNGKey(0)
    kx, kp = jax.random.split(key)

    x = jax.random.normal(kx, (B, T, D), dtype=jnp.float32)
    lengths = jnp.array([12, 7], dtype=jnp.int32)   # variable-length sequences
    params = init_params(kp, D, H)

    # T=12 with time_chunk=8 exercises chunking, time/batch padding and length masking.
    out = jax.block_until_ready(bilstm_layer(x, lengths, params, time_chunk=8))
    ref = jax.block_until_ready(ref_bilstm(x, lengths, params))

    assert out.shape == (B, T, 2 * H), out.shape
    max_err = float(jnp.max(jnp.abs(out - ref)))
    assert jnp.allclose(out, ref, atol=2e-5, rtol=1e-5), max_err
    print("KERNEL_OK")
</pallas_src>

<mosaic_0001>
module attributes {stable_mosaic.version = 11 : i64} {
  func.func @_proj_kernel(%arg0: i32, %arg1: memref<128x16xf32, #tpu.memory_space<vmem>>, %arg2: memref<16x256xf32, #tpu.memory_space<vmem>>, %arg3: memref<1x256xf32, #tpu.memory_space<vmem>>, %arg4: memref<128x256xf32, #tpu.memory_space<vmem>>) attributes {dimension_semantics = [#tpu.dimension_semantics<parallel>], iteration_bounds = array<i64: 1>, scalar_prefetch = 0 : i64, scratch_operands = 0 : i64, tpu.core_type = #tpu.core_type<tc>, window_params = [{transform_indices = @transform_0, window_bounds = array<i64: 128, 16>}, {pipeline_mode = #tpu.pipeline_mode<synchronous>, transform_indices = @transform_1, window_bounds = array<i64: 16, 256>}, {pipeline_mode = #tpu.pipeline_mode<synchronous>, transform_indices = @transform_2, window_bounds = array<i64: 1, 256>}, {transform_indices = @transform_3, window_bounds = array<i64: 128, 256>}]} {
    %c0 = arith.constant 0 : index
    %c0_0 = arith.constant 0 : index
    %0 = vector.load %arg1[%c0, %c0_0] : memref<128x16xf32, #tpu.memory_space<vmem>>, vector<128x16xf32>
    %c0_1 = arith.constant 0 : index
    %c0_2 = arith.constant 0 : index
    %1 = vector.load %arg2[%c0_1, %c0_2] : memref<16x256xf32, #tpu.memory_space<vmem>>, vector<16x256xf32>
    %cst = arith.constant dense<0.000000e+00> : vector<128x256xf32>
    %2 = tpu.matmul %0, %1, %cst {dimension_numbers = #tpu.dot_dimension_numbers<[1], [0], [0], [1], [0, 0, 1, 1], [], []>} : vector<128x16xf32>, vector<16x256xf32>, vector<128x256xf32> -> vector<128x256xf32>
    %c0_3 = arith.constant 0 : index
    %c0_4 = arith.constant 0 : index
    %3 = vector.load %arg3[%c0_3, %c0_4] : memref<1x256xf32, #tpu.memory_space<vmem>>, vector<1x256xf32>
    %4 = vector.broadcast %3 : vector<1x256xf32> to vector<128x256xf32>
    %5 = arith.addf %2, %4 : vector<128x256xf32>
    %c0_5 = arith.constant 0 : index
    %c0_6 = arith.constant 0 : index
    %6 = vector.load %arg4[%c0_5, %c0_6] : memref<128x256xf32, #tpu.memory_space<vmem>>, vector<128x256xf32>
    tpu.vector_store %arg4[%c0_5, %c0_6], %5 {strides = array<i32>} : memref<128x256xf32, #tpu.memory_space<vmem>>, vector<128x256xf32>,
    return
  }
  func.func @transform_0(%arg0: i32) -> (i32, i32) {
    %c0_i32 = arith.constant 0 : i32
    %c0_i32_0 = arith.constant 0 : i32
    return %arg0, %c0_i32 : i32, i32
  }
  func.func @transform_1(%arg0: i32) -> (i32, i32) {
    %c0_i32 = arith.constant 0 : i32
    %c0_i32_0 = arith.constant 0 : i32
    %c0_i32_1 = arith.constant 0 : i32
    return %c0_i32, %c0_i32_0 : i32, i32
  }
  func.func @transform_2(%arg0: i32) -> (i32, i32) {
    %c0_i32 = arith.constant 0 : i32
    %c0_i32_0 = arith.constant 0 : i32
    %c0_i32_1 = arith.constant 0 : i32
    return %c0_i32, %c0_i32_0 : i32, i32
  }
  func.func @transform_3(%arg0: i32) -> (i32, i32) {
    %c0_i32 = arith.constant 0 : i32
    %c0_i32_0 = arith.constant 0 : i32
    return %arg0, %c0_i32 : i32, i32
  }
}

</mosaic_0001>

<llo_original>
// kernel: tpu_custom_call.1
$region0: #{tpu_custom_call.1}
  #allocation0 [shape = 'u32[]', space=smem, size = 0x4, offset = 0x4, fixed_abs, tag = 'smem constant byte address 0x4 - core index']
  #allocation1 [shape = 'u32[144,128]{1,0:T(1,128)}', space=vmem, size = 0x12000, scoped, tag = 'internal scratch']
  %s0 = inlined_call_operand.vmem [shape: f32[128,16], index: 0, kind: input, shape index: {}]
  %s1 = inlined_call_operand.vmem [shape: f32[16,256], index: 1, kind: input, shape index: {}]
  %s2 = inlined_call_operand.vmem [shape: f32[1,256], index: 2, kind: input, shape index: {}]
  %s3 = inlined_call_operand.hbm [shape: f32[128,256], index: 3, kind: output, shape index: {}]
  %s4 = sld [smem:[#allocation0]]
  $region22: #{tpu_custom_call.1} parent=0
    _
  %s6 = ssub.s32 1, %s4
  %s7 = scalar_select 0, %s6, %s4
  $region1: #{tpu_custom_call.1} parent=0
    #allocation2 [shape = 'u8[131072]{0}', space=vmem, size = 0x20000, scoped, tag = 'output window, operand 0, single buffered']
    #allocation3 [shape = 's32[1]{0}', space=sflag, size = 0x4, scoped, tag = 'scoped memory for tpu_custom_call.1']
    %8 = vsyncpa [#allocation3], 0
    // Predicated region
    $region2: #{tpu_custom_call.1} parent=1 // pred_check
      _
    $region3: #{tpu_custom_call.1} parent=1 // pred_check_branch
      %10 = sbr.rel (0) target = $region5
    $region4: #{tpu_custom_call.1} parent=1 // pred_region
      _
    $region5: #{tpu_custom_call.1} parent=1 // pred_fallthru
      _
    // Predicated region
    $region6: #{tpu_custom_call.1} parent=1 // pred_check
      _
    $region7: #{tpu_custom_call.1} parent=1 // pred_check_branch
      %12 = sbr.rel (0) target = $region9
    $region8: #{tpu_custom_call.1} parent=1 // pred_region
      _
    $region9: #{tpu_custom_call.1} parent=1 // pred_fallthru
      _
    // Predicated region
    $region10: #{tpu_custom_call.1} parent=1 // pred_check
      _
    $region11: #{tpu_custom_call.1} parent=1 // pred_check_branch
      %14 = sbr.rel (0) target = $region13
    $region12: #{tpu_custom_call.1} parent=1 // pred_region
      _
    $region13: #{tpu_custom_call.1} parent=1 // pred_fallthru
      _
    %v15 = vld [vmem:[%s0] sm:$0xff]
    %v16 = vld [vmem:[%s0 + $0x8] sm:$0xff]
    %v17 = vld [vmem:[%s0 + $0x10] sm:$0xff]
    %v18 = vld [vmem:[%s0 + $0x18] sm:$0xff]
    %v19 = vld [vmem:[%s0 + $0x20] sm:$0xff]
    %v20 = vld [vmem:[%s0 + $0x28] sm:$0xff]
    %v21 = vld [vmem:[%s0 + $0x30] sm:$0xff]
    %v22 = vld [vmem:[%s0 + $0x38] sm:$0xff]
    %v23 = vld [vmem:[%s0 + $0x40] sm:$0xff]
    %v24 = vld [vmem:[%s0 + $0x48] sm:$0xff]
    %v25 = vld [vmem:[%s0 + $0x50] sm:$0xff]
    %v26 = vld [vmem:[%s0 + $0x58] sm:$0xff]
    %v27 = vld [vmem:[%s0 + $0x60] sm:$0xff]
    %v28 = vld [vmem:[%s0 + $0x68] sm:$0xff]
    %v29 = vld [vmem:[%s0 + $0x70] sm:$0xff]
    %v30 = vld [vmem:[%s0 + $0x78] sm:$0xff]
    %v31 = vld [vmem:[%s1] sm:$0xff]
    %v32 = vld [vmem:[%s1 + $0x8] sm:$0xff]
    %v33 = vld [vmem:[%s1 + $0x10] sm:$0xff]
    %v34 = vld [vmem:[%s1 + $0x18] sm:$0xff]
    %v35 = vld [vmem:[%s2] sm:$0x3]
    %v37 = vlaneseq
    %v38 = vshrl.u32 %v37, 7
    %v39 = vsub.s32 0, %v38
    %v40 = vrot.slane %v35, %v39
    %v41 = vlaneseq
    %v42 = vshrl.u32 %v41, 7
    %v43 = vsub.s32 1, %v42
    %v44 = vrot.slane %v35, %v43
    %vm47 = vcmask 130048
    %v49 = vsel %vm47, %v15, 0
    %v52 = vsel %vm47, %v16, 0
    %v55 = vsel %vm47, %v17, 0
    %v58 = vsel %vm47, %v18, 0
    %v61 = vsel %vm47, %v19, 0
    %v64 = vsel %vm47, %v20, 0
    %v67 = vsel %vm47, %v21, 0
    %v70 = vsel %vm47, %v22, 0
    %v73 = vsel %vm47, %v23, 0
    %v76 = vsel %vm47, %v24, 0
    %v79 = vsel %vm47, %v25, 0
    %v82 = vsel %vm47, %v26, 0
    %v85 = vsel %vm47, %v27, 0
    %v88 = vsel %vm47, %v28, 0
    %v91 = vsel %vm47, %v29, 0
    %v94 = vsel %vm47, %v30, 0
    %96 = vmatprep.subr.mxu0 0.0
    %97 = vmatpush1.msra.mxu0 0.0
    %98 = vmatprep.subr.mxu0 0.0
    %99 = vmatpush1.msra.mxu0 0.0
    %100 = vmatprep.subr.mxu0 0.0
    %101 = vmatpush1.msra.mxu0 0.0
    %102 = vmatprep.subr.mxu0 0.0
    %103 = vmatpush1.msra.mxu0 0.0
    %104 = vmatprep.subr.mxu0 0.0
    %105 = vmatpush1.msra.mxu0 0.0
    %106 = vmatprep.subr.mxu0 0.0
    %107 = vmatpush1.msra.mxu0 0.0
    %108 = vmatprep.subr.mxu0 0.0
    %109 = vmatpush1.msra.mxu0 0.0
    %110 = vmatprep.subr.mxu0 0.0
    %111 = vmatpush1.msra.mxu0 0.0
    %112 = vmatprep.subr.mxu0 0.0
    %113 = vmatpush1.msra.mxu0 0.0
    %114 = vmatprep.subr.mxu0 0.0
    %115 = vmatpush1.msra.mxu0 0.0
    %116 = vmatprep.subr.mxu0 0.0
    %117 = vmatpush1.msra.mxu0 0.0
    %118 = vmatprep.subr.mxu0 0.0
    %119 = vmatpush1.msra.mxu0 0.0
    %120 = vmatprep.subr.mxu0 0.0
    %121 = vmatpush1.msra.mxu0 0.0
    %122 = vmatprep.subr.mxu0 0.0
    %123 = vmatpush1.msra.mxu0 0.0
    %124 = vmatprep.subr.mxu0 %v34
    %125 = vmatpush1.msra.mxu0 %v33
    %126 = vmatprep.subr.mxu0 %v32
    %127 = vmatpush1.msra.mxu0 %v31
    %128 = vmatprep.subr.mxu0 0.0
    %129 = vmatpush2.msra.mxu0 0.0
    %130 = vmatprep.subr.mxu0 0.0
    %131 = vmatpush2.msra.mxu0 0.0
    %132 = vmatprep.subr.mxu0 0.0
    %133 = vmatpush2.msra.mxu0 0.0
    %134 = vmatprep.subr.mxu0 0.0
    %135 = vmatpush2.msra.mxu0 0.0
    %136 = vmatprep.subr.mxu0 0.0
    %137 = vmatpush2.msra.mxu0 0.0
    %138 = vmatprep.subr.mxu0 0.0
    %139 = vmatpush2.msra.mxu0 0.0
    %140 = vmatprep.subr.mxu0 0.0
    %141 = vmatpush2.msra.mxu0 0.0
    %142 = vmatprep.subr.mxu0 0.0
    %143 = vmatpush2.msra.mxu0 0.0
    %144 = vmatprep.subr.mxu0 0.0
    %145 = vmatpush2.msra.mxu0 0.0
    %146 = vmatprep.subr.mxu0 0.0
    %147 = vmatpush2.msra.mxu0 0.0
    %148 = vmatprep.subr.mxu0 0.0
    %149 = vmatpush2.msra.mxu0 0.0
    %150 = vmatprep.subr.mxu0 0.0
    %151 = vmatpush2.msra.mxu0 0.0
    %152 = vmatprep.subr.mxu0 0.0
    %153 = vmatpush2.msra.mxu0 0.0
    %154 = vmatprep.subr.mxu0 0.0
    %155 = vmatpush2.msra.mxu0 0.0
    %156 = vmatprep.subr.mxu0 0.0
    %157 = vmatpush2.msra.mxu0 0.0
    %158 = vmatprep.subr.mxu0 0.0
    %159 = vmatpush2.msra.mxu0 0.0
    %160 = vmatprep.mubr.f32.mxu0 0.0
    %161 = vmatmul.mubr.f32.gmra.mxu0 %v49
    %v162 = vpop.f32.mrf.mxu0
    %v163 = vadd.f32 %v40, %v162
    %v164 = vpop.f32.mrf.mxu0
    %v165 = vadd.f32 %v44, %v164
    %166 = vmatprep.mubr.f32.mxu0 0.0
    %167 = vmatmul.mubr.f32.gmra.mxu0 %v52
    %v168 = vpop.f32.mrf.mxu0
    %v169 = vadd.f32 %v40, %v168
    %v170 = vpop.f32.mrf.mxu0
    %v171 = vadd.f32 %v44, %v170
    %172 = vmatprep.mubr.f32.mxu0 0.0
    %173 = vmatmul.mubr.f32.gmra.mxu0 %v55
    %v174 = vpop.f32.mrf.mxu0
    %v175 = vadd.f32 %v40, %v174
    %v176 = vpop.f32.mrf.mxu0
    %v177 = vadd.f32 %v44, %v176
    %178 = vmatprep.mubr.f32.mxu0 0.0
    %179 = vmatmul.mubr.f32.gmra.mxu0 %v58
    %v180 = vpop.f32.mrf.mxu0
    %v181 = vadd.f32 %v40, %v180
    %v182 = vpop.f32.mrf.mxu0
    %v183 = vadd.f32 %v44, %v182
    %184 = vmatprep.mubr.f32.mxu0 0.0
    %185 = vmatmul.mubr.f32.gmra.mxu0 %v61
    %v186 = vpop.f32.mrf.mxu0
    %v187 = vadd.f32 %v40, %v186
    %v188 = vpop.f32.mrf.mxu0
    %v189 = vadd.f32 %v44, %v188
    %190 = vmatprep.mubr.f32.mxu0 0.0
    %191 = vmatmul.mubr.f32.gmra.mxu0 %v64
    %v192 = vpop.f32.mrf.mxu0
    %v193 = vadd.f32 %v40, %v192
    %v194 = vpop.f32.mrf.mxu0
    %v195 = vadd.f32 %v44, %v194
    %196 = vmatprep.mubr.f32.mxu0 0.0
    %197 = vmatmul.mubr.f32.gmra.mxu0 %v67
    %v198 = vpop.f32.mrf.mxu0
    %v199 = vadd.f32 %v40, %v198
    %v200 = vpop.f32.mrf.mxu0
    %v201 = vadd.f32 %v44, %v200
    %202 = vmatprep.mubr.f32.mxu0 0.0
    %203 = vmatmul.mubr.f32.gmra.mxu0 %v70
    %v204 = vpop.f32.mrf.mxu0
    %v205 = vadd.f32 %v40, %v204
    %v206 = vpop.f32.mrf.mxu0
    %v207 = vadd.f32 %v44, %v206
    %208 = vmatprep.mubr.f32.mxu0 0.0
    %209 = vmatmul.mubr.f32.gmra.mxu0 %v73
    %v210 = vpop.f32.mrf.mxu0
    %v211 = vadd.f32 %v40, %v210
    %v212 = vpop.f32.mrf.mxu0
    %v213 = vadd.f32 %v44, %v212
    %214 = vmatprep.mubr.f32.mxu0 0.0
    %215 = vmatmul.mubr.f32.gmra.mxu0 %v76
    %v216 = vpop.f32.mrf.mxu0
    %v217 = vadd.f32 %v40, %v216
    %v218 = vpop.f32.mrf.mxu0
    %v219 = vadd.f32 %v44, %v218
    %220 = vmatprep.mubr.f32.mxu0 0.0
    %221 = vmatmul.mubr.f32.gmra.mxu0 %v79
    %v222 = vpop.f32.mrf.mxu0
    %v223 = vadd.f32 %v40, %v222
    %v224 = vpop.f32.mrf.mxu0
    %v225 = vadd.f32 %v44, %v224
    %226 = vmatprep.mubr.f32.mxu0 0.0
    %227 = vmatmul.mubr.f32.gmra.mxu0 %v82
    %v228 = vpop.f32.mrf.mxu0
    %v229 = vadd.f32 %v40, %v228
    %v230 = vpop.f32.mrf.mxu0
    %v231 = vadd.f32 %v44, %v230
    %232 = vmatprep.mubr.f32.mxu0 0.0
    %233 = vmatmul.mubr.f32.gmra.mxu0 %v85
    %v234 = vpop.f32.mrf.mxu0
    %v235 = vadd.f32 %v40, %v234
    %v236 = vpop.f32.mrf.mxu0
    %v237 = vadd.f32 %v44, %v236
    %238 = vmatprep.mubr.f32.mxu0 0.0
    %239 = vmatmul.mubr.f32.gmra.mxu0 %v88
    %v240 = vpop.f32.mrf.mxu0
    %v241 = vadd.f32 %v40, %v240
    %v242 = vpop.f32.mrf.mxu0
    %v243 = vadd.f32 %v44, %v242
    %244 = vmatprep.mubr.f32.mxu0 0.0
    %245 = vmatmul.mubr.f32.gmra.mxu0 %v91
    %v246 = vpop.f32.mrf.mxu0
    %v247 = vadd.f32 %v40, %v246
    %v248 = vpop.f32.mrf.mxu0
    %v249 = vadd.f32 %v44, %v248
    %250 = vmatprep.mubr.f32.mxu0 0.0
    %251 = vmatmul.mubr.f32.gmra.mxu0 %v94
    %v252 = vpop.f32.mrf.mxu0
    %v253 = vadd.f32 %v40, %v252
    %v254 = vpop.f32.mrf.mxu0
    %v255 = vadd.f32 %v44, %v254
    %256 = vdwg.mxu0
    %257 = vst [vmem:[#allocation2] sm:$0xff] %v163
    %258 = vst [vmem:[#allocation2 + $0x8] sm:$0xff] %v165
    %259 = vst [vmem:[#allocation2 + $0x10] sm:$0xff] %v169
    %260 = vst [vmem:[#allocation2 + $0x18] sm:$0xff] %v171
    %261 = vst [vmem:[#allocation2 + $0x20] sm:$0xff] %v175
    %262 = vst [vmem:[#allocation2 + $0x28] sm:$0xff] %v177
    %263 = vst [vmem:[#allocation2 + $0x30] sm:$0xff] %v181
    %264 = vst [vmem:[#allocation2 + $0x38] sm:$0xff] %v183
    %265 = vst [vmem:[#allocation2 + $0x40] sm:$0xff] %v187
    %266 = vst [vmem:[#allocation2 + $0x48] sm:$0xff] %v189
    %267 = vst [vmem:[#allocation2 + $0x50] sm:$0xff] %v193
    %268 = vst [vmem:[#allocation2 + $0x58] sm:$0xff] %v195
    %269 = vst [vmem:[#allocation2 + $0x60] sm:$0xff] %v199
    %270 = vst [vmem:[#allocation2 + $0x68] sm:$0xff] %v201
    %271 = vst [vmem:[#allocation2 + $0x70] sm:$0xff] %v205
    %272 = vst [vmem:[#allocation2 + $0x78] sm:$0xff] %v207
    %273 = vst [vmem:[#allocation2 + $0x80] sm:$0xff] %v211
    %274 = vst [vmem:[#allocation2 + $0x88] sm:$0xff] %v213
    %275 = vst [vmem:[#allocation2 + $0x90] sm:$0xff] %v217
    %276 = vst [vmem:[#allocation2 + $0x98] sm:$0xff] %v219
    %277 = vst [vmem:[#allocation2 + $0xa0] sm:$0xff] %v223
    %278 = vst [vmem:[#allocation2 + $0xa8] sm:$0xff] %v225
    %279 = vst [vmem:[#allocation2 + $0xb0] sm:$0xff] %v229
    %280 = vst [vmem:[#allocation2 + $0xb8] sm:$0xff] %v231
    %281 = vst [vmem:[#allocation2 + $0xc0] sm:$0xff] %v235
    %282 = vst [vmem:[#allocation2 + $0xc8] sm:$0xff] %v237
    %283 = vst [vmem:[#allocation2 + $0xd0] sm:$0xff] %v241
    %284 = vst [vmem:[#allocation2 + $0xd8] sm:$0xff] %v243
    %285 = vst [vmem:[#allocation2 + $0xe0] sm:$0xff] %v247
    %286 = vst [vmem:[#allocation2 + $0xe8] sm:$0xff] %v249
    %287 = vst [vmem:[#allocation2 + $0xf0] sm:$0xff] %v253
    %288 = vst [vmem:[#allocation2 + $0xf8] sm:$0xff] %v255
    // Predicated region
    $region14: #{tpu_custom_call.1} parent=1 // pred_check
      _
    $region15: #{tpu_custom_call.1} parent=1 // pred_check_branch
      %290 = sbr.rel (0) target = $region17
    $region16: #{tpu_custom_call.1} parent=1 // pred_region
      %s292 = ssub.s32 4096, 4096
      %293 = vsyncadd [#allocation3], %s292
      %s294 = sshll.u32 [#allocation2], 4
      %s295 = int_to_ptr.vmem [resolvable:$true] %s294
      %300 = dma.vmem_to_hbm [thread:$0]  %s295, 4096, %s3, [#allocation3], 256, 256, 16
    $region17: #{tpu_custom_call.1} parent=1 // pred_fallthru
      _
    // Predicated region
    $region18: #{tpu_custom_call.1} parent=1 // pred_check
      _
    $region19: #{tpu_custom_call.1} parent=1 // pred_check_branch
      %302 = sbr.rel (0) target = $region21
    $region20: #{tpu_custom_call.1} parent=1 // pred_region
      %303 = dma.done [#allocation3], 4096
    $region21: #{tpu_custom_call.1} parent=1 // pred_fallthru
      _
    %304 = vsyncpa [#allocation3], 1

</llo_original>
